<compile_context>
chip_gen: v5e
topology: v5e:2x2
jax: 0.10.0
libtpu: 0.0.40
codegen_flags: <defaults>
</compile_context>

<pallas_src>
import functools

import jax
import jax.numpy as jnp
from jax.experimental import pallas as pl
from jax.experimental.pallas import tpu as pltpu


_VMEM_LIMIT_BYTES = 32 << 20   # explicit scoped-VMEM limit (safe on v5e/v6e/v7x)
_VMEM_DATA_BUDGET = 24 << 20   # what the double-buffered tiles are sized against


def _tm_kernel(x_ref, w1_ref, w2_ref, o_ref, *, pr):
    """One batch tile of the fused forward pass.

    x_ref:  [tile_rows, K]    packed, lane-dense activations (K = pack*nm)
    w1_ref: [K, 2*pr]         [block_diag(W1[:r].T) | block_diag(W1[r:].T)]
    w2_ref: [2*pr, NN]        [block_diag(W2.T) ; zeros]   (NN = pack*nn)
    o_ref:  [tile_rows, NN]
    """
    x = x_ref[...]
    # Single MXU pass for both W1 halves: y = [ya | yb] (f32 accumulation).
    y = jnp.dot(x, w1_ref[...], preferred_element_type=jnp.float32)
    # Gate ya*yb by pairing column j with column j+pr via an XLU lane roll.
    # shift == half the axis length, so roll direction is immaterial.
    z = y * pltpu.roll(y, shift=pr, axis=1)
    # Second matmul: rows [pr:2*pr] of w2_ref are zero, so only the gated half
    # of z contributes; K stays a multiple of 128 (no lane slice needed).
    o_ref[...] = jnp.dot(
        z.astype(w2_ref.dtype), w2_ref[...], preferred_element_type=jnp.float32
    ).astype(o_ref.dtype)
    # NOTE: K fits in a single block here, so no K grid axis / accumulator.


def choose_pack(nm, batch):
    """How many logical rows to pack per physical 128-lane row."""
    if nm >= 128:
        return 1
    pack = max(1, 128 // nm)
    while pack > 1 and batch % pack != 0:
        pack //= 2
    return pack


def prepare_params(w1, w2, *, pack, dtype=jnp.bfloat16):
    """One-time weight prep (keep OUT of the per-step forward path).

    w1: [2r, nm], w2: [nn, r]  (PyTorch nn.Linear weight layout).
    Returns (w1_cat [pack*nm, 2*pack*r], w2_pad [2*pack*r, pack*nn]).
    """
    two_r, nm = w1.shape
    nn, r = w2.shape
    assert two_r == 2 * r and w2.shape[1] == r

    w1a = w1[:r].T   # [nm, r]
    w1b = w1[r:].T   # [nm, r]
    w2t = w2.T       # [r, nn]

    bd = jax.scipy.linalg.block_diag
    w1a_bd = bd(*([w1a] * pack))                          # [pack*nm, pack*r]
    w1b_bd = bd(*([w1b] * pack))                          # [pack*nm, pack*r]
    w2_bd = bd(*([w2t] * pack))                           # [pack*r,  pack*nn]

    # Fused W1 (one MXU pass) and zero-padded W2 (keeps K = 2*pack*r).
    w1_cat = jnp.concatenate([w1a_bd, w1b_bd], axis=1)
    w2_pad = jnp.concatenate([w2_bd, jnp.zeros_like(w2_bd)], axis=0)

    if dtype is not None:  # bf16 halves the weight/activation HBM streams
        w1_cat = w1_cat.astype(dtype)
        w2_pad = w2_pad.astype(dtype)
    return w1_cat, w2_pad


def _choose_tile_rows(bp, max_rows, target_steps):
    """Largest VMEM-fitting tile with an even (>= target_steps) step count."""
    if bp <= 8 or bp % 8 != 0:
        return bp                                       # degenerate tiny batch
    steps = max(target_steps, -(-bp // max_rows))       # ceil-div
    if steps > 1 and steps % 2 == 1:
        steps += 1                                      # balance v7x's 2 cores
    tile = -(-bp // steps)
    tile = min(bp, ((tile + 7) // 8) * 8)               # round up to 8-multiple
    while bp % tile != 0:                               # must tile bp evenly
        tile -= 8
    return max(tile, 8)


def transpose_matmul_forward(x, w1_cat, w2_pad, *, pack, nn,
                             target_steps=2, out_dtype=None):
    """x: [B, n*m]; weights from prepare_params. Returns [B, n*n]."""
    B, nm = x.shape
    K, R2 = w1_cat.shape
    R2b, NN = w2_pad.shape
    assert K == pack * nm and R2b == R2 and NN == pack * nn
    assert B % pack == 0, "batch must be a multiple of the pack factor"
    Bp = B // pack
    pr = R2 // 2

    compute_dtype = w1_cat.dtype
    out_dtype = compute_dtype if out_dtype is None else out_dtype

    # Lane-dense packing is a free row-major reshape.  Prefer producing bf16
    # activations upstream; then the cast below is a no-op (no extra HBM pass).
    xp = x.reshape(Bp, K)
    if xp.dtype != compute_dtype:
        xp = xp.astype(compute_dtype)

    # ---- batch-tile selection ----------------------------------------------
    bx = jnp.dtype(compute_dtype).itemsize
    bo = jnp.dtype(out_dtype).itemsize
    w_bytes = (w1_cat.size + w2_pad.size) * jnp.dtype(compute_dtype).itemsize
    # Per packed row: double-buffered x & out tiles + f32 intermediates
    # (y, rolled y, gated z).
    per_row = 2 * (K * bx + NN * bo) + 3 * R2 * 4
    budget = max(per_row * 8, _VMEM_DATA_BUDGET - 2 * w_bytes)
    max_rows = max(8, (budget // per_row) // 8 * 8)

    # Tile as large as VMEM allows, but keep an even >= 2-step "parallel" grid
    # so v7x's two TensorCores both get work (costs ~0.35 us on v5e/v6e).
    tile_rows = _choose_tile_rows(Bp, max_rows, target_steps)
    grid = (Bp // tile_rows,)

    cost = pl.CostEstimate(
        flops=2 * Bp * K * R2 + 2 * Bp * R2 * NN,
        transcendentals=0,
        bytes_accessed=Bp * K * bx + w_bytes + Bp * NN * bo,
    )

    out_p = pl.pallas_call(
        functools.partial(_tm_kernel, pr=pr),
        out_shape=jax.ShapeDtypeStruct((Bp, NN), out_dtype),
        grid_spec=pltpu.PrefetchScalarGridSpec(
            num_scalar_prefetch=0,
            grid=grid,
            in_specs=[
                pl.BlockSpec((tile_rows, K), lambda i: (i, 0)),
                # Constant weight blocks: their index_map never changes, so the
                # pipeline keeps the resident copy (no re-DMA).  Double-buffer
                # cost is only ~2 x ~100 KiB here, so we skip pl.Buffered(1)
                # for portability.
                pl.BlockSpec((K, R2), lambda i: (0, 0)),
                pl.BlockSpec((R2, NN), lambda i: (0, 0)),
            ],
            out_specs=pl.BlockSpec((tile_rows, NN), lambda i: (i, 0)),
        ),
        compiler_params=pltpu.CompilerParams(
            dimension_semantics=("parallel",),
            vmem_limit_bytes=_VMEM_LIMIT_BYTES,
        ),
        cost_estimate=cost,
    )(xp, w1_cat, w2_pad)

    # Free row-major un-pack back to [B, n*n].
    return out_p.reshape(B, nn)


if __name__ == "__main__":
    # Shapes consistent with the module: n=8, m=4, r=16 (nm=32, nn=64).
    n, m, r = 8, 4, 16
    B = 1024

    key = jax.random.PRNGKey(0)
    kx, k1, k2 = jax.random.split(key, 3)

    # Deterministic PyTorch-Linear-like uniform init.
    bound1 = 1.0 / (n * m) ** 0.5
    bound2 = 1.0 / r ** 0.5
    w1 = jax.random.uniform(k1, (2 * r, n * m), jnp.float32, -bound1, bound1)
    w2 = jax.random.uniform(k2, (n * n, r), jnp.float32, -bound2, bound2)
    x = jax.random.normal(kx, (B, n * m), jnp.float32)

    pack = choose_pack(n * m, B)                        # -> 4 for nm=32
    # One-time weight prep (kept out of the per-call path), bf16 weights.
    w1_cat, w2_pad = prepare_params(w1, w2, pack=pack, dtype=jnp.bfloat16)
    # Feed bf16 activations so the kernel read stream is halved.
    x_bf16 = x.astype(jnp.bfloat16)

    out = transpose_matmul_forward(x_bf16, w1_cat, w2_pad, pack=pack, nn=n * n)
    out = jax.block_until_ready(out)
    assert out.shape == (B, n * n)

    # Reference #1: same bf16 operand rounding as the kernel, f32 accumulation.
    xb = x_bf16.astype(jnp.float32)
    w1b = w1.astype(jnp.bfloat16).astype(jnp.float32)
    w2b = w2.astype(jnp.bfloat16).astype(jnp.float32)
    y_ref = xb @ w1b.T
    z_ref = (y_ref[:, :r] * y_ref[:, r:]).astype(jnp.bfloat16).astype(jnp.float32)
    ref_bf = z_ref @ w2b.T
    assert jnp.allclose(out.astype(jnp.float32), ref_bf, atol=1e-2, rtol=2e-2), (
        "mismatch vs bf16-matched reference")

    # Reference #2: pure f32 module semantics (loose sanity check of the math).
    y32 = x @ w1.T
    ref32 = (y32[:, :r] * y32[:, r:]) @ w2.T
    assert jnp.allclose(out.astype(jnp.float32), ref32, atol=1e-1, rtol=1e-1), (
        "mismatch vs f32 reference")

    print("KERNEL_OK")
</pallas_src>

<mosaic_0001>
module attributes {stable_mosaic.version = 11 : i64} {
  func.func @_tm_kernel(%arg0: i32, %arg1: memref<128x128xbf16, #tpu.memory_space<vmem>>, %arg2: memref<128x128xbf16, #tpu.memory_space<vmem>>, %arg3: memref<128x256xbf16, #tpu.memory_space<vmem>>, %arg4: memref<128x256xbf16, #tpu.memory_space<vmem>>) attributes {dimension_semantics = [#tpu.dimension_semantics<parallel>], iteration_bounds = array<i64: 2>, scalar_prefetch = 0 : i64, scratch_operands = 0 : i64, tpu.core_type = #tpu.core_type<tc>, window_params = [{transform_indices = @transform_0, window_bounds = array<i64: 128, 128>}, {pipeline_mode = #tpu.pipeline_mode<synchronous>, transform_indices = @transform_1, window_bounds = array<i64: 128, 128>}, {pipeline_mode = #tpu.pipeline_mode<synchronous>, transform_indices = @transform_2, window_bounds = array<i64: 128, 256>}, {transform_indices = @transform_3, window_bounds = array<i64: 128, 256>}]} {
    %c0 = arith.constant 0 : index
    %c0_0 = arith.constant 0 : index
    %0 = vector.load %arg1[%c0, %c0_0] : memref<128x128xbf16, #tpu.memory_space<vmem>>, vector<128x128xbf16>
    %c0_1 = arith.constant 0 : index
    %c0_2 = arith.constant 0 : index
    %1 = vector.load %arg2[%c0_1, %c0_2] : memref<128x128xbf16, #tpu.memory_space<vmem>>, vector<128x128xbf16>
    %cst = arith.constant dense<0.000000e+00> : vector<128x128xf32>
    %2 = tpu.matmul %0, %1, %cst {dimension_numbers = #tpu.dot_dimension_numbers<[1], [0], [0], [1], [0, 0, 1, 1], [], []>} : vector<128x128xbf16>, vector<128x128xbf16>, vector<128x128xf32> -> vector<128x128xf32>
    %c64_i32 = arith.constant 64 : i32
    %3 = tpu.dynamic_rotate %2 by %c64_i32 dim 1 : vector<128x128xf32>, i32 -> vector<128x128xf32>
    %4 = arith.mulf %2, %3 : vector<128x128xf32>
    %5 = arith.truncf %4 : vector<128x128xf32> to vector<128x128xbf16>
    %c0_3 = arith.constant 0 : index
    %c0_4 = arith.constant 0 : index
    %6 = vector.load %arg3[%c0_3, %c0_4] : memref<128x256xbf16, #tpu.memory_space<vmem>>, vector<128x256xbf16>
    %cst_5 = arith.constant dense<0.000000e+00> : vector<128x256xf32>
    %7 = tpu.matmul %5, %6, %cst_5 {dimension_numbers = #tpu.dot_dimension_numbers<[1], [0], [0], [1], [0, 0, 1, 1], [], []>} : vector<128x128xbf16>, vector<128x256xbf16>, vector<128x256xf32> -> vector<128x256xf32>
    %8 = arith.truncf %7 : vector<128x256xf32> to vector<128x256xbf16>
    %c0_6 = arith.constant 0 : index
    %c0_7 = arith.constant 0 : index
    %9 = vector.load %arg4[%c0_6, %c0_7] : memref<128x256xbf16, #tpu.memory_space<vmem>>, vector<128x256xbf16>
    tpu.vector_store %arg4[%c0_6, %c0_7], %8 {strides = array<i32>} : memref<128x256xbf16, #tpu.memory_space<vmem>>, vector<128x256xbf16>,
    return
  }
  func.func @transform_0(%arg0: i32) -> (i32, i32) {
    %c0_i32 = arith.constant 0 : i32
    %c0_i32_0 = arith.constant 0 : i32
    return %arg0, %c0_i32 : i32, i32
  }
  func.func @transform_1(%arg0: i32) -> (i32, i32) {
    %c0_i32 = arith.constant 0 : i32
    %c0_i32_0 = arith.constant 0 : i32
    %c0_i32_1 = arith.constant 0 : i32
    return %c0_i32, %c0_i32_0 : i32, i32
  }
  func.func @transform_2(%arg0: i32) -> (i32, i32) {
    %c0_i32 = arith.constant 0 : i32
    %c0_i32_0 = arith.constant 0 : i32
    %c0_i32_1 = arith.constant 0 : i32
    return %c0_i32, %c0_i32_0 : i32, i32
  }
  func.func @transform_3(%arg0: i32) -> (i32, i32) {
    %c0_i32 = arith.constant 0 : i32
    %c0_i32_0 = arith.constant 0 : i32
    return %arg0, %c0_i32 : i32, i32
  }
}

</mosaic_0001>

<llo_original>
// kernel: tpu_custom_call.1
$region0: #{tpu_custom_call.1}
  #allocation0 [shape = 'u32[]', space=smem, size = 0x4, offset = 0x4, fixed_abs, tag = 'smem constant byte address 0x4 - core index']
  #allocation1 [shape = 'u32[72,128]{1,0:T(1,128)}', space=vmem, size = 0x9000, scoped, tag = 'internal scratch']
  %s0 = inlined_call_operand.hbm [shape: bf16[256,128], index: 0, kind: input, shape index: {}]
  %s1 = inlined_call_operand.hbm [shape: bf16[128,128], index: 1, kind: input, shape index: {}]
  %s2 = inlined_call_operand.hbm [shape: bf16[128,256], index: 2, kind: input, shape index: {}]
  %s3 = inlined_call_operand.hbm [shape: bf16[256,256], index: 3, kind: output, shape index: {}]
  %s4 = sld [smem:[#allocation0]]
  $region57: #{tpu_custom_call.1} parent=0
    _
  %s6 = ssub.s32 1, %s4
  %s7 = scalar_select 0, %s6, %s4
  $region1: #{tpu_custom_call.1} parent=0
    #allocation2 [shape = 'u8[65536]{0}', space=vmem, size = 0x10000, scoped, tag = 'input window, operand 0']
    #allocation3 [shape = 's32[2]{0}', space=sflag, size = 0x8, scoped, tag = 'scoped memory for tpu_custom_call.1']
    #allocation4 [shape = 's32[2]{0}', space=sflag, size = 0x8, scoped, tag = 'scoped memory for tpu_custom_call.1']
    #allocation5 [shape = 'u8[32768]{0}', space=vmem, size = 0x8000, scoped, tag = 'input window, operand 1, single buffered']
    #allocation6 [shape = 's32[1]{0}', space=sflag, size = 0x4, scoped, tag = 'scoped memory for tpu_custom_call.1']
    #allocation7 [shape = 'u8[65536]{0}', space=vmem, size = 0x10000, scoped, tag = 'input window, operand 2, single buffered']
    #allocation8 [shape = 'u8[131072]{0}', space=vmem, size = 0x20000, scoped, tag = 'output window, operand 0']
    %8 = vsyncpa [#allocation3], 0
    %s9 = scalar_lea.sflag [#allocation3], 1
    %10 = vsyncpa %s9, 0
    %11 = vsyncpa [#allocation6], 0
    %12 = vsyncpa [#allocation4], 0
    %s13 = scalar_lea.sflag [#allocation4], 1
    %14 = vsyncpa %s13, 0
    loop: start=0, step=1, limit=4
    $region2: #{tpu_custom_call.1} parent=1 // loop_pre_header
      _
    $region3: #{tpu_custom_call.1} parent=1 // loop_header
      %s16 = sphi 0, %s20
      %p17 = scmp.ge.s32.totalorder %s16, 4
      %s26 = sphi 0, %s28
      %s29 = sphi 0, %s26
      %s30 = sphi 0, %s29
      %s46 = sphi 0, %s30
      %s50 = sphi 0, %s50
      %s52 = sphi 0, %s50
      %s53 = sphi 0, %s52
      %s67 = sphi 0, %s53
      %s71 = sphi 0, %s71
      %s73 = sphi 0, %s71
      %s74 = sphi 0, %s73
      %s88 = sphi 0, %s74
      %s94 = sphi 0, %s96
      %s97 = sphi 0, %s94
      %s98 = sphi 0, %s97
      %s114 = sphi 0, %s98
    $region4: #{tpu_custom_call.1} parent=1 // loop_header_branch
      %19 = sbr.rel (%p17) target = $region8
    $region5: #{tpu_custom_call.1} parent=1 // loop_body
      %s21 = ssub.s32 %s16, 1
      %s22 = ssub.s32 %s16, 2
      %s23 = sadd.s32 %s16, 1
      %s24 = ssub.s32 %s16, %s23
      %p25 = scmp.eq.s32.totalorder %s24, 0
      %s27 = sadd.s32 %s26, 1
      %s28 = scalar_select %p25, %s26, %s27
      %p31 = pneg %p25
      %p32 = scmp.eq.s32.totalorder %s16, 1
      %p33 = por %p31, %p32
      %p34 = scmp.ne.s32.totalorder %s26, %s29
      %p35 = scmp.eq.s32.totalorder %s16, 0
      %p36 = por %p34, %p35
      %p37 = scmp.ne.s32.totalorder %s26, %s29
      %p38 = scmp.eq.s32.totalorder %s21, 1
      %p39 = por %p37, %p38
      %p40 = scmp.ne.s32.totalorder %s29, %s30
      %p41 = scmp.eq.s32.totalorder %s21, 0
      %p42 = por %p40, %p41
      %p43 = scmp.ne.s32.totalorder %s29, %s30
      %p44 = scmp.eq.s32.totalorder %s22, 1
      %p45 = por %p43, %p44
      %p47 = scmp.ne.s32.totalorder %s30, %s46
      %p48 = scmp.eq.s32.totalorder %s22, 0
      %p49 = por %p47, %p48
      %s51 = sadd.s32 %s50, 1
      %p54 = scmp.eq.s32.totalorder %s16, 1
      %p55 = scmp.ne.s32.totalorder %s50, %s52
      %p56 = scmp.eq.s32.totalorder %s16, 0
      %p57 = por %p55, %p56
      %p58 = scmp.ne.s32.totalorder %s50, %s52
      %p59 = scmp.eq.s32.totalorder %s21, 1
      %p60 = por %p58, %p59
      %p61 = scmp.ne.s32.totalorder %s52, %s53
      %p62 = scmp.eq.s32.totalorder %s21, 0
      %p63 = por %p61, %p62
      %p64 = scmp.ne.s32.totalorder %s52, %s53
      %p65 = scmp.eq.s32.totalorder %s22, 1
      %p66 = por %p64, %p65
      %p68 = scmp.ne.s32.totalorder %s53, %s67
      %p69 = scmp.eq.s32.totalorder %s22, 0
      %p70 = por %p68, %p69
      %s72 = sadd.s32 %s71, 1
      %p75 = scmp.eq.s32.totalorder %s16, 1
      %p76 = scmp.ne.s32.totalorder %s71, %s73
      %p77 = scmp.eq.s32.totalorder %s16, 0
      %p78 = por %p76, %p77
      %p79 = scmp.ne.s32.totalorder %s71, %s73
      %p80 = scmp.eq.s32.totalorder %s21, 1
      %p81 = por %p79, %p80
      %p82 = scmp.ne.s32.totalorder %s73, %s74
      %p83 = scmp.eq.s32.totalorder %s21, 0
      %p84 = por %p82, %p83
      %p85 = scmp.ne.s32.totalorder %s73, %s74
      %p86 = scmp.eq.s32.totalorder %s22, 1
      %p87 = por %p85, %p86
      %p89 = scmp.ne.s32.totalorder %s74, %s88
      %p90 = scmp.eq.s32.totalorder %s22, 0
      %p91 = por %p89, %p90
      %s92 = ssub.s32 %s16, %s23
      %p93 = scmp.eq.s32.totalorder %s92, 0
      %s95 = sadd.s32 %s94, 1
      %s96 = scalar_select %p93, %s94, %s95
      %p99 = pneg %p93
      %p100 = scmp.eq.s32.totalorder %s16, 1
      %p101 = por %p99, %p100
      %p102 = scmp.ne.s32.totalorder %s94, %s97
      %p103 = scmp.eq.s32.totalorder %s16, 0
      %p104 = por %p102, %p103
      %p105 = scmp.ne.s32.totalorder %s94, %s97
      %p106 = scmp.eq.s32.totalorder %s21, 1
      %p107 = por %p105, %p106
      %p108 = scmp.ne.s32.totalorder %s97, %s98
      %p109 = scmp.eq.s32.totalorder %s21, 0
      %p110 = por %p108, %p109
      %p111 = scmp.ne.s32.totalorder %s97, %s98
      %p112 = scmp.eq.s32.totalorder %s22, 1
      %p113 = por %p111, %p112
      %p115 = scmp.ne.s32.totalorder %s98, %s114
      %p116 = scmp.eq.s32.totalorder %s22, 0
      %p117 = por %p115, %p116
      %p118 = scmp.le.s32.totalorder 1, %s16
      %p119 = scmp.lt.s32.totalorder %s16, 3
      %p120 = pnand %p118, %p119
      %p121 = pneg %p120
      // Predicated region
      $region9: #{tpu_custom_call.1} parent=5 // pred_check
        _
      $region10: #{tpu_custom_call.1} parent=5 // pred_check_branch
        %123 = sbr.rel (%p120) target = $region12
      $region11: #{tpu_custom_call.1} parent=5 // pred_region
        %s124 = ssub.s32 %s16, 1
        // Predicated region
        $region13: #{tpu_custom_call.1} parent=11 // pred_check
          %p125 = pneg %p63
        $region14: #{tpu_custom_call.1} parent=11 // pred_check_branch
          %127 = sbr.rel (%p125) target = $region16
        $region15: #{tpu_custom_call.1} parent=11 // pred_region
          %129 = vsyncadd [#allocation6], 0
          %s130 = sshll.u32 %s1, 4
          %s131 = int_to_ptr.hbm [resolvable:$true] %s130
          %s132 = sshll.u32 [#allocation5], 4
          %s133 = int_to_ptr.vmem [resolvable:$true] %s132
          %138 = dma.hbm_to_vmem [thread:$0]  %s131, 1024, %s133, [#allocation6], 64, 64, 4
        $region16: #{tpu_custom_call.1} parent=11 // pred_fallthru
          _
        // Predicated region
        $region17: #{tpu_custom_call.1} parent=11 // pred_check
          %p139 = pneg %p84
        $region18: #{tpu_custom_call.1} parent=11 // pred_check_branch
          %141 = sbr.rel (%p139) target = $region20
        $region19: #{tpu_custom_call.1} parent=11 // pred_region
          %143 = vsyncadd [#allocation6], 0
          %s144 = sshll.u32 %s2, 4
          %s145 = int_to_ptr.hbm [resolvable:$true] %s144
          %s146 = sshll.u32 [#allocation7], 4
          %s147 = int_to_ptr.vmem [resolvable:$true] %s146
          %152 = dma.hbm_to_vmem [thread:$0]  %s145, 2048, %s147, [#allocation6], 128, 128, 8
        $region20: #{tpu_custom_call.1} parent=11 // pred_fallthru
          _
      $region12: #{tpu_custom_call.1} parent=5 // pred_fallthru
        _
      %p153 = scmp.lt.s32.totalorder %s16, 2
      // Predicated region
      $region21: #{tpu_custom_call.1} parent=5 // pred_check
        %p154 = pneg %p153
      $region22: #{tpu_custom_call.1} parent=5 // pred_check_branch
        %156 = sbr.rel (%p154) target = $region24
      $region23: #{tpu_custom_call.1} parent=5 // pred_region
        // Predicated region
        $region25: #{tpu_custom_call.1} parent=23 // pred_check
          %p157 = pneg %p36
        $region26: #{tpu_custom_call.1} parent=23 // pred_check_branch
          %159 = sbr.rel (%p157) target = $region28
        $region27: #{tpu_custom_call.1} parent=23 // pred_region
          %s160 = sand.u32 %s26, 1
          %s161 = scalar_lea.sflag [#allocation3], %s160
          %s162 = sand.u32 %s26, 1
          %s163 = smul.addr %s162, 64
          %s164 = scalar_lea.vmem [#allocation2], %s163
          %s165 = smul.u32 16, %s16
          %167 = vsyncadd %s161, 0
          %s168 = smul.addr %s165, 4
          %s169 = scalar_lea.hbm %s0, %s168
          %s170 = sshll.u32 %s169, 4
          %s171 = int_to_ptr.hbm [resolvable:$true] %s170
          %s172 = sshll.u32 %s164, 4
          %s173 = int_to_ptr.vmem [resolvable:$true] %s172
          %178 = dma.hbm_to_vmem [thread:$0]  %s171, 1024, %s173, %s161, 64, 64, 4
        $region28: #{tpu_custom_call.1} parent=23 // pred_fallthru
          _
      $region24: #{tpu_custom_call.1} parent=5 // pred_fallthru
        _
      %p179 = scmp.le.s32.totalorder 1, %s16
      %p180 = scmp.lt.s32.totalorder %s16, 3
      %p181 = pnand %p179, %p180
      %p182 = pneg %p181
      // Predicated region
      $region29: #{tpu_custom_call.1} parent=5 // pred_check
        _
      $region30: #{tpu_custom_call.1} parent=5 // pred_check_branch
        %184 = sbr.rel (%p181) target = $region32
      $region31: #{tpu_custom_call.1} parent=5 // pred_region
        %s185 = ssub.s32 %s16, 1
        %s186 = sand.u32 %s29, 1
        %s187 = scalar_lea.sflag [#allocation3], %s186
        %s188 = sand.u32 %s29, 1
        %s189 = smul.addr %s188, 64
        %s190 = scalar_lea.vmem [#allocation2], %s189
        // Predicated region
        $region33: #{tpu_custom_call.1} parent=31 // pred_check
          %p191 = pneg %p42
        $region34: #{tpu_custom_call.1} parent=31 // pred_check_branch
          %193 = sbr.rel (%p191) target = $region36
        $region35: #{tpu_custom_call.1} parent=31 // pred_region
          %195 = dma.done %s187, 1024
        $region36: #{tpu_custom_call.1} parent=31 // pred_fallthru
          _
        // Predicated region
        $region37: #{tpu_custom_call.1} parent=31 // pred_check
          %p196 = pneg %p63
        $region38: #{tpu_custom_call.1} parent=31 // pred_check_branch
          %198 = sbr.rel (%p196) target = $region40
        $region39: #{tpu_custom_call.1} parent=31 // pred_region
          %200 = dma.done [#allocation6], 1024
        $region40: #{tpu_custom_call.1} parent=31 // pred_fallthru
          _
        // Predicated region
        $region41: #{tpu_custom_call.1} parent=31 // pred_check
          %p201 = pneg %p84
        $region42: #{tpu_custom_call.1} parent=31 // pred_check_branch
          %203 = sbr.rel (%p201) target = $region44
        $region43: #{tpu_custom_call.1} parent=31 // pred_region
          %205 = dma.done [#allocation6], 2048
        $region44: #{tpu_custom_call.1} parent=31 // pred_fallthru
          _
        %s206 = sand.u32 %s29, 1
        %s207 = scalar_lea.sflag [#allocation3], %s206
        %s208 = sand.u32 %s29, 1
        %s209 = smul.addr %s208, 64
        %s210 = scalar_lea.vmem [#allocation2], %s209
        %p211 = pneg %p42
        %p212 = pneg %p39
        %p213 = pneg %p63
        %p214 = pneg %p60
        %p215 = pneg %p84
        %p216 = pneg %p81
        %p217 = pneg %p110
        %p218 = pneg %p107
        %s219 = sand.u32 %s97, 1
        %s220 = scalar_lea.sflag [#allocation4], %s219
        %s221 = sand.u32 %s97, 1
        %s222 = smul.addr %s221, 128
        %s223 = scalar_lea.vmem [#allocation8], %s222
        %s224 = smul.u32 16, %s21
        %s225 = smul.u32 16, %s21
        %v226 = vld [vmem:[%s190] sm:$0xf]
        %v227 = vld [vmem:[%s190 + $0x4] sm:$0xf]
        %v228 = vld [vmem:[%s190 + $0x8] sm:$0xf]
        %v229 = vld [vmem:[%s190 + $0xc] sm:$0xf]
        %v230 = vld [vmem:[%s190 + $0x10] sm:$0xf]
        %v231 = vld [vmem:[%s190 + $0x14] sm:$0xf]
        %v232 = vld [vmem:[%s190 + $0x18] sm:$0xf]
        %v233 = vld [vmem:[%s190 + $0x1c] sm:$0xf]
        %v234 = vld [vmem:[%s190 + $0x20] sm:$0xf]
        %v235 = vld [vmem:[%s190 + $0x24] sm:$0xf]
        %v236 = vld [vmem:[%s190 + $0x28] sm:$0xf]
        %v237 = vld [vmem:[%s190 + $0x2c] sm:$0xf]
        %v238 = vld [vmem:[%s190 + $0x30] sm:$0xf]
        %v239 = vld [vmem:[%s190 + $0x34] sm:$0xf]
        %v240 = vld [vmem:[%s190 + $0x38] sm:$0xf]
        %v241 = vld [vmem:[%s190 + $0x3c] sm:$0xf]
        %v242 = vld [vmem:[#allocation5] sm:$0xf]
        %v243 = vld [vmem:[#allocation5 + $0x4] sm:$0xf]
        %v244 = vld [vmem:[#allocation5 + $0x8] sm:$0xf]
        %v245 = vld [vmem:[#allocation5 + $0xc] sm:$0xf]
        %v246 = vld [vmem:[#allocation5 + $0x10] sm:$0xf]
        %v247 = vld [vmem:[#allocation5 + $0x14] sm:$0xf]
        %v248 = vld [vmem:[#allocation5 + $0x18] sm:$0xf]
        %v249 = vld [vmem:[#allocation5 + $0x1c] sm:$0xf]
        %v250 = vld [vmem:[#allocation5 + $0x20] sm:$0xf]
        %v251 = vld [vmem:[#allocation5 + $0x24] sm:$0xf]
        %v252 = vld [vmem:[#allocation5 + $0x28] sm:$0xf]
        %v253 = vld [vmem:[#allocation5 + $0x2c] sm:$0xf]
        %v254 = vld [vmem:[#allocation5 + $0x30] sm:$0xf]
        %v255 = vld [vmem:[#allocation5 + $0x34] sm:$0xf]
        %v256 = vld [vmem:[#allocation5 + $0x38] sm:$0xf]
        %v257 = vld [vmem:[#allocation5 + $0x3c] sm:$0xf]
        %v274 = vunpack.c.l.b16 %v226
        %v275 = vunpack.c.l.b16 %v227
        %v276 = vunpack.c.l.b16 %v228
        %v277 = vunpack.c.l.b16 %v229
        %v278 = vunpack.c.l.b16 %v230
        %v279 = vunpack.c.l.b16 %v231
        %v280 = vunpack.c.l.b16 %v232
        %v281 = vunpack.c.l.b16 %v233
        %v282 = vunpack.c.l.b16 %v234
        %v283 = vunpack.c.l.b16 %v235
        %v284 = vunpack.c.l.b16 %v236
        %v285 = vunpack.c.l.b16 %v237
        %v286 = vunpack.c.l.b16 %v238
        %v287 = vunpack.c.l.b16 %v239
        %v288 = vunpack.c.l.b16 %v240
        %v289 = vunpack.c.l.b16 %v241
        %v290 = vpack.c.b16 %v275, %v274
        %v291 = vpack.c.b16 %v277, %v276
        %v292 = vpack.c.b16 %v279, %v278
        %v293 = vpack.c.b16 %v281, %v280
        %v294 = vpack.c.b16 %v283, %v282
        %v295 = vpack.c.b16 %v285, %v284
        %v296 = vpack.c.b16 %v287, %v286
        %v297 = vpack.c.b16 %v289, %v288
        %v322 = vunpack.c.l.b16 %v242
        %v323 = vunpack.c.l.b16 %v243
        %v324 = vunpack.c.l.b16 %v244
        %v325 = vunpack.c.l.b16 %v245
        %v326 = vunpack.c.l.b16 %v246
        %v327 = vunpack.c.l.b16 %v247
        %v328 = vunpack.c.l.b16 %v248
        %v329 = vunpack.c.l.b16 %v249
        %v330 = vunpack.c.l.b16 %v250
        %v331 = vunpack.c.l.b16 %v251
        %v332 = vunpack.c.l.b16 %v252
        %v333 = vunpack.c.l.b16 %v253
        %v334 = vunpack.c.l.b16 %v254
        %v335 = vunpack.c.l.b16 %v255
        %v336 = vunpack.c.l.b16 %v256
        %v337 = vunpack.c.l.b16 %v257
        %v338 = vpack.c.b16 %v323, %v322
        %v339 = vpack.c.b16 %v325, %v324
        %v340 = vpack.c.b16 %v327, %v326
        %v341 = vpack.c.b16 %v329, %v328
        %v342 = vpack.c.b16 %v331, %v330
        %v343 = vpack.c.b16 %v333, %v332
        %v344 = vpack.c.b16 %v335, %v334
        %v345 = vpack.c.b16 %v337, %v336
        %354 = vmatpush.bf16.msra.mxu0 %v345
        %355 = vmatpush.bf16.msra.mxu0 %v344
        %356 = vmatpush.bf16.msra.mxu0 %v343
        %357 = vmatpush.bf16.msra.mxu0 %v342
        %358 = vmatpush.bf16.msra.mxu0 %v341
        %359 = vmatpush.bf16.msra.mxu0 %v340
        %360 = vmatpush.bf16.msra.mxu0 %v339
        %361 = vmatpush.bf16.msra.mxu0 %v338
        %362 = vmatmul.bf16.gmra.mxu0 %v290
        %v363 = vpop.f32.mrf.mxu0
        %v364 = vadd.f32 0.0, %v363
        %v365 = vpop.f32.mrf.mxu0
        %v366 = vadd.f32 0.0, %v365
        %367 = vmatmul.bf16.gmra.mxu0 %v291
        %v368 = vpop.f32.mrf.mxu0
        %v369 = vadd.f32 0.0, %v368
        %v370 = vpop.f32.mrf.mxu0
        %v371 = vadd.f32 0.0, %v370
        %372 = vmatmul.bf16.gmra.mxu0 %v292
        %v373 = vpop.f32.mrf.mxu0
        %v374 = vadd.f32 0.0, %v373
        %v375 = vpop.f32.mrf.mxu0
        %v376 = vadd.f32 0.0, %v375
        %377 = vmatmul.bf16.gmra.mxu0 %v293
        %v378 = vpop.f32.mrf.mxu0
        %v379 = vadd.f32 0.0, %v378
        %v380 = vpop.f32.mrf.mxu0
        %v381 = vadd.f32 0.0, %v380
        %382 = vmatmul.bf16.gmra.mxu0 %v294
        %v383 = vpop.f32.mrf.mxu0
        %v384 = vadd.f32 0.0, %v383
        %v385 = vpop.f32.mrf.mxu0
        %v386 = vadd.f32 0.0, %v385
        %387 = vmatmul.bf16.gmra.mxu0 %v295
        %v388 = vpop.f32.mrf.mxu0
        %v389 = vadd.f32 0.0, %v388
        %v390 = vpop.f32.mrf.mxu0
        %v391 = vadd.f32 0.0, %v390
        %392 = vmatmul.bf16.gmra.mxu0 %v296
        %v393 = vpop.f32.mrf.mxu0
        %v394 = vadd.f32 0.0, %v393
        %v395 = vpop.f32.mrf.mxu0
        %v396 = vadd.f32 0.0, %v395
        %397 = vmatmul.bf16.gmra.mxu0 %v297
        %v398 = vpop.f32.mrf.mxu0
        %v399 = vadd.f32 0.0, %v398
        %v400 = vpop.f32.mrf.mxu0
        %v401 = vadd.f32 0.0, %v400
        %402 = vdwg.mxu0
        %403 = vrot.lane.b32.xlu0 %v364, 64
        %v404 = vpop.permute.xlu0 %403
        %405 = vrot.lane.b32.xlu0 %v366, 64
        %v406 = vpop.permute.xlu0 %405
        %407 = vrot.lane.b32.xlu0 %v369, 64
        %v408 = vpop.permute.xlu0 %407
        %409 = vrot.lane.b32.xlu0 %v371, 64
        %v410 = vpop.permute.xlu0 %409
        %411 = vrot.lane.b32.xlu0 %v374, 64
        %v412 = vpop.permute.xlu0 %411
        %413 = vrot.lane.b32.xlu0 %v376, 64
        %v414 = vpop.permute.xlu0 %413
        %415 = vrot.lane.b32.xlu0 %v379, 64
        %v416 = vpop.permute.xlu0 %415
        %417 = vrot.lane.b32.xlu0 %v381, 64
        %v418 = vpop.permute.xlu0 %417
        %419 = vrot.lane.b32.xlu0 %v384, 64
        %v420 = vpop.permute.xlu0 %419
        %421 = vrot.lane.b32.xlu0 %v386, 64
        %v422 = vpop.permute.xlu0 %421
        %423 = vrot.lane.b32.xlu0 %v389, 64
        %v424 = vpop.permute.xlu0 %423
        %425 = vrot.lane.b32.xlu0 %v391, 64
        %v426 = vpop.permute.xlu0 %425
        %427 = vrot.lane.b32.xlu0 %v394, 64
        %v428 = vpop.permute.xlu0 %427
        %429 = vrot.lane.b32.xlu0 %v396, 64
        %v430 = vpop.permute.xlu0 %429
        %431 = vrot.lane.b32.xlu0 %v399, 64
        %v432 = vpop.permute.xlu0 %431
        %433 = vrot.lane.b32.xlu0 %v401, 64
        %v434 = vpop.permute.xlu0 %433
        %v435 = vmul.f32 %v364, %v404
        %v436 = vmul.f32 %v366, %v406
        %v437 = vmul.f32 %v369, %v408
        %v438 = vmul.f32 %v371, %v410
        %v439 = vmul.f32 %v374, %v412
        %v440 = vmul.f32 %v376, %v414
        %v441 = vmul.f32 %v379, %v416
        %v442 = vmul.f32 %v381, %v418
        %v443 = vmul.f32 %v384, %v420
        %v444 = vmul.f32 %v386, %v422
        %v445 = vmul.f32 %v389, %v424
        %v446 = vmul.f32 %v391, %v426
        %v447 = vmul.f32 %v394, %v428
        %v448 = vmul.f32 %v396, %v430
        %v449 = vmul.f32 %v399, %v432
        %v450 = vmul.f32 %v401, %v434
        %v451 = vpack.c.bf16 %v436, %v435
        %v452 = vpack.c.bf16 %v438, %v437
        %v453 = vpack.c.bf16 %v440, %v439
        %v454 = vpack.c.bf16 %v442, %v441
        %v455 = vpack.c.bf16 %v444, %v443
        %v456 = vpack.c.bf16 %v446, %v445
        %v457 = vpack.c.bf16 %v448, %v447
        %v458 = vpack.c.bf16 %v450, %v449
        %v459 = vld [vmem:[#allocation7] sm:$0xff]
        %v460 = vld [vmem:[#allocation7 + $0x8] sm:$0xff]
        %v461 = vld [vmem:[#allocation7 + $0x10] sm:$0xff]
        %v462 = vld [vmem:[#allocation7 + $0x18] sm:$0xff]
        %v463 = vld [vmem:[#allocation7 + $0x20] sm:$0xff]
        %v464 = vld [vmem:[#allocation7 + $0x28] sm:$0xff]
        %v465 = vld [vmem:[#allocation7 + $0x30] sm:$0xff]
        %v466 = vld [vmem:[#allocation7 + $0x38] sm:$0xff]
        %v467 = vld [vmem:[#allocation7 + $0x40] sm:$0xff]
        %v468 = vld [vmem:[#allocation7 + $0x48] sm:$0xff]
        %v469 = vld [vmem:[#allocation7 + $0x50] sm:$0xff]
        %v470 = vld [vmem:[#allocation7 + $0x58] sm:$0xff]
        %v471 = vld [vmem:[#allocation7 + $0x60] sm:$0xff]
        %v472 = vld [vmem:[#allocation7 + $0x68] sm:$0xff]
        %v473 = vld [vmem:[#allocation7 + $0x70] sm:$0xff]
        %v474 = vld [vmem:[#allocation7 + $0x78] sm:$0xff]
        %v491 = vunpack.c.l.b16 %v459
        %v492 = vunpack.c.h.b16 %v459
        %v493 = vunpack.c.l.b16 %v460
        %v494 = vunpack.c.h.b16 %v460
        %v495 = vunpack.c.l.b16 %v461
        %v496 = vunpack.c.h.b16 %v461
        %v497 = vunpack.c.l.b16 %v462
        %v498 = vunpack.c.h.b16 %v462
        %v499 = vunpack.c.l.b16 %v463
        %v500 = vunpack.c.h.b16 %v463
        %v501 = vunpack.c.l.b16 %v464
        %v502 = vunpack.c.h.b16 %v464
        %v503 = vunpack.c.l.b16 %v465
        %v504 = vunpack.c.h.b16 %v465
        %v505 = vunpack.c.l.b16 %v466
        %v506 = vunpack.c.h.b16 %v466
        %v507 = vunpack.c.l.b16 %v467
        %v508 = vunpack.c.h.b16 %v467
        %v509 = vunpack.c.l.b16 %v468
        %v510 = vunpack.c.h.b16 %v468
        %v511 = vunpack.c.l.b16 %v469
        %v512 = vunpack.c.h.b16 %v469
        %v513 = vunpack.c.l.b16 %v470
        %v514 = vunpack.c.h.b16 %v470
        %v515 = vunpack.c.l.b16 %v471
        %v516 = vunpack.c.h.b16 %v471
        %v517 = vunpack.c.l.b16 %v472
        %v518 = vunpack.c.h.b16 %v472
        %v519 = vunpack.c.l.b16 %v473
        %v520 = vunpack.c.h.b16 %v473
        %v521 = vunpack.c.l.b16 %v474
        %v522 = vunpack.c.h.b16 %v474
        %v523 = vpack.c.b16 %v493, %v491
        %v524 = vpack.c.b16 %v494, %v492
        %v525 = vpack.c.b16 %v497, %v495
        %v526 = vpack.c.b16 %v498, %v496
        %v527 = vpack.c.b16 %v501, %v499
        %v528 = vpack.c.b16 %v502, %v500
        %v529 = vpack.c.b16 %v505, %v503
        %v530 = vpack.c.b16 %v506, %v504
        %v531 = vpack.c.b16 %v509, %v507
        %v532 = vpack.c.b16 %v510, %v508
        %v533 = vpack.c.b16 %v513, %v511
        %v534 = vpack.c.b16 %v514, %v512
        %v535 = vpack.c.b16 %v517, %v515
        %v536 = vpack.c.b16 %v518, %v516
        %v537 = vpack.c.b16 %v521, %v519
        %v538 = vpack.c.b16 %v522, %v520
        %555 = vmatpush.bf16.msra.mxu0 %v537
        %556 = vmatpush.bf16.msra.mxu0 %v535
        %557 = vmatpush.bf16.msra.mxu0 %v533
        %558 = vmatpush.bf16.msra.mxu0 %v531
        %559 = vmatpush.bf16.msra.mxu0 %v529
        %560 = vmatpush.bf16.msra.mxu0 %v527
        %561 = vmatpush.bf16.msra.mxu0 %v525
        %562 = vmatpush.bf16.msra.mxu0 %v523
        %563 = vmatmul.bf16.gmra.mxu0 %v451
        %v564 = vpop.f32.mrf.mxu0
        %v565 = vadd.f32 0.0, %v564
        %v566 = vpop.f32.mrf.mxu0
        %v567 = vadd.f32 0.0, %v566
        %568 = vmatmul.bf16.gmra.mxu0 %v452
        %v569 = vpop.f32.mrf.mxu0
        %v570 = vadd.f32 0.0, %v569
        %v571 = vpop.f32.mrf.mxu0
        %v572 = vadd.f32 0.0, %v571
        %573 = vmatmul.bf16.gmra.mxu0 %v453
        %v574 = vpop.f32.mrf.mxu0
        %v575 = vadd.f32 0.0, %v574
        %v576 = vpop.f32.mrf.mxu0
        %v577 = vadd.f32 0.0, %v576
        %578 = vmatmul.bf16.gmra.mxu0 %v454
        %v579 = vpop.f32.mrf.mxu0
        %v580 = vadd.f32 0.0, %v579
        %v581 = vpop.f32.mrf.mxu0
        %v582 = vadd.f32 0.0, %v581
        %583 = vmatmul.bf16.gmra.mxu0 %v455
        %v584 = vpop.f32.mrf.mxu0
        %v585 = vadd.f32 0.0, %v584
        %v586 = vpop.f32.mrf.mxu0
        %v587 = vadd.f32 0.0, %v586
        %588 = vmatmul.bf16.gmra.mxu0 %v456
        %v589 = vpop.f32.mrf.mxu0
        %v590 = vadd.f32 0.0, %v589
        %v591 = vpop.f32.mrf.mxu0
        %v592 = vadd.f32 0.0, %v591
        %593 = vmatmul.bf16.gmra.mxu0 %v457
        %v594 = vpop.f32.mrf.mxu0
        %v595 = vadd.f32 0.0, %v594
        %v596 = vpop.f32.mrf.mxu0
        %v597 = vadd.f32 0.0, %v596
        %598 = vmatmul.bf16.gmra.mxu0 %v458
        %v599 = vpop.f32.mrf.mxu0
        %v600 = vadd.f32 0.0, %v599
        %v601 = vpop.f32.mrf.mxu0
        %v602 = vadd.f32 0.0, %v601
        %603 = vdwg.mxu0
        %604 = vmatpush.bf16.msra.mxu0 %v538
        %605 = vmatpush.bf16.msra.mxu0 %v536
        %606 = vmatpush.bf16.msra.mxu0 %v534
        %607 = vmatpush.bf16.msra.mxu0 %v532
        %608 = vmatpush.bf16.msra.mxu0 %v530
        %609 = vmatpush.bf16.msra.mxu0 %v528
        %610 = vmatpush.bf16.msra.mxu0 %v526
        %611 = vmatpush.bf16.msra.mxu0 %v524
        %612 = vmatmul.bf16.gmra.mxu0 %v451
        %v613 = vpop.f32.mrf.mxu0
        %v614 = vadd.f32 0.0, %v613
        %v615 = vpop.f32.mrf.mxu0
        %v616 = vadd.f32 0.0, %v615
        %617 = vmatmul.bf16.gmra.mxu0 %v452
        %v618 = vpop.f32.mrf.mxu0
        %v619 = vadd.f32 0.0, %v618
        %v620 = vpop.f32.mrf.mxu0
        %v621 = vadd.f32 0.0, %v620
        %622 = vmatmul.bf16.gmra.mxu0 %v453
        %v623 = vpop.f32.mrf.mxu0
        %v624 = vadd.f32 0.0, %v623
        %v625 = vpop.f32.mrf.mxu0
        %v626 = vadd.f32 0.0, %v625
        %627 = vmatmul.bf16.gmra.mxu0 %v454
        %v628 = vpop.f32.mrf.mxu0
        %v629 = vadd.f32 0.0, %v628
        %v630 = vpop.f32.mrf.mxu0
        %v631 = vadd.f32 0.0, %v630
        %632 = vmatmul.bf16.gmra.mxu0 %v455
        %v633 = vpop.f32.mrf.mxu0
        %v634 = vadd.f32 0.0, %v633
        %v635 = vpop.f32.mrf.mxu0
        %v636 = vadd.f32 0.0, %v635
        %637 = vmatmul.bf16.gmra.mxu0 %v456
        %v638 = vpop.f32.mrf.mxu0
        %v639 = vadd.f32 0.0, %v638
        %v640 = vpop.f32.mrf.mxu0
        %v641 = vadd.f32 0.0, %v640
        %642 = vmatmul.bf16.gmra.mxu0 %v457
        %v643 = vpop.f32.mrf.mxu0
        %v644 = vadd.f32 0.0, %v643
        %v645 = vpop.f32.mrf.mxu0
        %v646 = vadd.f32 0.0, %v645
        %647 = vmatmul.bf16.gmra.mxu0 %v458
        %v648 = vpop.f32.mrf.mxu0
        %v649 = vadd.f32 0.0, %v648
        %v650 = vpop.f32.mrf.mxu0
        %v651 = vadd.f32 0.0, %v650
        %652 = vdwg.mxu0
        %v653 = vpack.c.bf16 %v614, %v565
        %v654 = vpack.c.bf16 %v616, %v567
        %v655 = vpack.c.bf16 %v619, %v570
        %v656 = vpack.c.bf16 %v621, %v572
        %v657 = vpack.c.bf16 %v624, %v575
        %v658 = vpack.c.bf16 %v626, %v577
        %v659 = vpack.c.bf16 %v629, %v580
        %v660 = vpack.c.bf16 %v631, %v582
        %v661 = vpack.c.bf16 %v634, %v585
        %v662 = vpack.c.bf16 %v636, %v587
        %v663 = vpack.c.bf16 %v639, %v590
        %v664 = vpack.c.bf16 %v641, %v592
        %v665 = vpack.c.bf16 %v644, %v595
        %v666 = vpack.c.bf16 %v646, %v597
        %v667 = vpack.c.bf16 %v649, %v600
        %v668 = vpack.c.bf16 %v651, %v602
        %669 = vst [vmem:[%s223] sm:$0xff] %v653
        %670 = vst [vmem:[%s223 + $0x8] sm:$0xff] %v654
        %671 = vst [vmem:[%s223 + $0x10] sm:$0xff] %v655
        %672 = vst [vmem:[%s223 + $0x18] sm:$0xff] %v656
        %673 = vst [vmem:[%s223 + $0x20] sm:$0xff] %v657
        %674 = vst [vmem:[%s223 + $0x28] sm:$0xff] %v658
        %675 = vst [vmem:[%s223 + $0x30] sm:$0xff] %v659
        %676 = vst [vmem:[%s223 + $0x38] sm:$0xff] %v660
        %677 = vst [vmem:[%s223 + $0x40] sm:$0xff] %v661
        %678 = vst [vmem:[%s223 + $0x48] sm:$0xff] %v662
        %679 = vst [vmem:[%s223 + $0x50] sm:$0xff] %v663
        %680 = vst [vmem:[%s223 + $0x58] sm:$0xff] %v664
        %681 = vst [vmem:[%s223 + $0x60] sm:$0xff] %v665
        %682 = vst [vmem:[%s223 + $0x68] sm:$0xff] %v666
        %683 = vst [vmem:[%s223 + $0x70] sm:$0xff] %v667
        %684 = vst [vmem:[%s223 + $0x78] sm:$0xff] %v668
        %s685 = sand.u32 %s97, 1
        %s686 = scalar_lea.sflag [#allocation4], %s685
        %s687 = sand.u32 %s97, 1
        %s688 = smul.addr %s687, 128
        %s689 = scalar_lea.vmem [#allocation8], %s688
        // Predicated region
        $region45: #{tpu_custom_call.1} parent=31 // pred_check
          %p690 = pneg %p107
        $region46: #{tpu_custom_call.1} parent=31 // pred_check_branch
          %692 = sbr.rel (%p690) target = $region48
        $region47: #{tpu_custom_call.1} parent=31 // pred_region
          %s693 = smul.u32 16, %s21
          %695 = vsyncadd %s686, 0
          %s696 = smul.addr %s693, 2
          %s697 = smul.addr %s696, 4
          %s698 = scalar_lea.hbm %s3, %s697
          %s699 = sshll.u32 %s689, 4
          %s700 = int_to_ptr.vmem [resolvable:$true] %s699
          %s701 = sshll.u32 %s698, 4
          %s702 = int_to_ptr.hbm [resolvable:$true] %s701
          %707 = dma.vmem_to_hbm [thread:$0]  %s700, 2048, %s702, %s686, 128, 128, 8
        $region48: #{tpu_custom_call.1} parent=31 // pred_fallthru
          _
      $region32: #{tpu_custom_call.1} parent=5 // pred_fallthru
        _
      %p708 = scmp.le.s32.totalorder 2, %s16
      // Predicated region
      $region49: #{tpu_custom_call.1} parent=5 // pred_check
        %p709 = pneg %p708
      $region50: #{tpu_custom_call.1} parent=5 // pred_check_branch
        %711 = sbr.rel (%p709) target = $region52
      $region51: #{tpu_custom_call.1} parent=5 // pred_region
        %s712 = ssub.s32 %s16, 2
        // Predicated region
        $region53: #{tpu_custom_call.1} parent=51 // pred_check
          %p713 = pneg %p113
        $region54: #{tpu_custom_call.1} parent=51 // pred_check_branch
          %715 = sbr.rel (%p713) target = $region56
        $region55: #{tpu_custom_call.1} parent=51 // pred_region
          %s716 = sand.u32 %s98, 1
          %s717 = scalar_lea.sflag [#allocation4], %s716
          %s718 = sand.u32 %s98, 1
          %s719 = smul.addr %s718, 128
          %s720 = scalar_lea.vmem [#allocation8], %s719
          %722 = dma.done %s717, 2048
        $region56: #{tpu_custom_call.1} parent=51 // pred_fallthru
          _
      $region52: #{tpu_custom_call.1} parent=5 // pred_fallthru
        _
    $region6: #{tpu_custom_call.1} parent=1 // loop_footer
      %s20 = sadd.s32 1, %s16
    $region7: #{tpu_custom_call.1} parent=1 // loop_footer_branch
      %15 = sbr.rel target = $region3
    $region8: #{tpu_custom_call.1} parent=1 // loop_exit
      _
    %723 = vsyncpa [#allocation3], 1
    %s724 = scalar_lea.sflag [#allocation3], 1
    %725 = vsyncpa %s724, 1
    %726 = vsyncpa [#allocation6], 1
    %727 = vsyncpa [#allocation4], 1
    %s728 = scalar_lea.sflag [#allocation4], 1
    %729 = vsyncpa %s728, 1

</llo_original>
